<compile_context>
chip_gen: v6e
topology: v6e:2x2x1
jax: 0.10.0
libtpu: 0.0.40
codegen_flags: <defaults>
</compile_context>

<pallas_src>
import functools

import jax
import jax.numpy as jnp
from jax import lax
from jax.experimental import pallas as pl
from jax.experimental.pallas import tpu as pltpu

IN_FEATS = 200
OUT_FEATS = 64
BN_EPS = 1e-5


def _round_up(x, m):
    return ((x + m - 1) // m) * m


def _plan_tiles(n):
    """Return (n_pad, tm, tk): padded node count, row tile, reduction tile."""
    if n <= 512:
        n_pad = max(_round_up(n, 128), 128)   # single block, lane + sublane aligned
        return n_pad, n_pad, n_pad
    tm, tk = 256, 512                         # 256x512 bf16 A tile = 256 KiB / buffer
    return _round_up(n, 512), tm, tk          # divisible by both tm and tk


def build_gcn_adj(edge_index, num_nodes, n_pad):
    """Dense Â = D^{-1/2}(A + I)D^{-1/2}, PyG gcn_norm semantics, zero-padded to n_pad."""
    src = edge_index[0]
    dst = edge_index[1]
    loop = jnp.arange(num_nodes, dtype=src.dtype)
    src = jnp.concatenate([src, loop])
    dst = jnp.concatenate([dst, loop])
    ones = jnp.ones(src.shape[0], jnp.float32)
    deg = jnp.zeros((num_nodes,), jnp.float32).at[dst].add(ones)   # in-degree at dst
    dinv = jnp.where(deg > 0, lax.rsqrt(deg), 0.0)
    norm = dinv[src] * dinv[dst]
    a_hat = jnp.zeros((n_pad, n_pad), jnp.float32).at[dst, src].add(norm)
    return a_hat


# ---------------------------------------------------------------- kernels

def linear_kernel(x_ref, w_ref, h_ref):
    # h = x @ W  (computed once; result cast to bf16 for the bandwidth-bound aggregation)
    h_ref[...] = jnp.dot(
        x_ref[...], w_ref[...], preferred_element_type=jnp.float32
    ).astype(h_ref.dtype)


def aggregate_kernel(a_ref, h_ref, b_ref, y_ref, psum_ref, psq_ref, acc_ref, *,
                     n_real, tm):
    # All grid queries happen at the kernel top level (never inside pl.when bodies).
    i = pl.program_id(0)
    k = pl.program_id(1)
    nk = pl.num_programs(1)
    row0 = i * tm
    rows = row0 + lax.broadcasted_iota(jnp.int32, (tm, 1), 0)
    row_mask = rows < n_real

    @pl.when(k == 0)
    def _():
        acc_ref[...] = jnp.zeros_like(acc_ref)

    # bf16 x bf16 -> f32 accumulate on the MXU
    acc_ref[...] += jnp.dot(
        a_ref[...], h_ref[...], preferred_element_type=jnp.float32
    )

    @pl.when(k == nk - 1)
    def _():
        # GCNConv adds bias after propagation; then ReLU.
        y = jnp.maximum(acc_ref[...] + b_ref[...], 0.0)
        y_ref[...] = y
        # BatchNorm partial statistics for this row tile (mask padded rows).
        ym = jnp.where(row_mask, y, 0.0)
        psum_ref[...] = jnp.sum(ym, axis=0).reshape(1, 1, OUT_FEATS)
        psq_ref[...] = jnp.sum(ym * ym, axis=0).reshape(1, 1, OUT_FEATS)


def bn_apply_kernel(y_ref, scale_ref, shift_ref, o_ref):
    o_ref[...] = y_ref[...] * scale_ref[...] + shift_ref[...]


# ---------------------------------------------------------------- wrapper

def labelg_forward(x, edge_index, w, bias, gamma, beta):
    n = x.shape[0]
    n_pad, tm, tk = _plan_tiles(n)
    grid_m = n_pad // tm
    grid_k = n_pad // tk
    f_pad = _round_up(IN_FEATS, 128)  # 200 -> 256, lane aligned

    # Glue: dense normalized adjacency (bf16 halves the dominant HBM stream).
    a_hat = build_gcn_adj(edge_index, n, n_pad).astype(jnp.bfloat16)

    x_pad = jnp.zeros((n_pad, f_pad), jnp.float32).at[:n, :IN_FEATS].set(x)
    w_pad = jnp.zeros((f_pad, OUT_FEATS), jnp.float32).at[:IN_FEATS, :].set(w)
    b2 = bias.reshape(1, OUT_FEATS).astype(jnp.float32)

    # 1) h = x @ W, hoisted out of the A-tile loop (row-tiled, output bf16).
    h = pl.pallas_call(
        linear_kernel,
        out_shape=jax.ShapeDtypeStruct((n_pad, OUT_FEATS), jnp.bfloat16),
        grid=(grid_m,),
        in_specs=[
            pl.BlockSpec((tm, f_pad), lambda i: (i, 0)),
            pl.BlockSpec((f_pad, OUT_FEATS), lambda i: (0, 0)),
        ],
        out_specs=pl.BlockSpec((tm, OUT_FEATS), lambda i: (i, 0)),
        compiler_params=pltpu.CompilerParams(
            dimension_semantics=("parallel",),
            vmem_limit_bytes=32 * 1024 * 1024,
        ),
    )(x_pad, w_pad)

    # 2) tiled A_hat @ h  + bias + ReLU + per-row-tile BN partial stats.
    y, psum, psq = pl.pallas_call(
        functools.partial(aggregate_kernel, n_real=n, tm=tm),
        out_shape=(
            jax.ShapeDtypeStruct((n_pad, OUT_FEATS), jnp.float32),
            jax.ShapeDtypeStruct((grid_m, 1, OUT_FEATS), jnp.float32),
            jax.ShapeDtypeStruct((grid_m, 1, OUT_FEATS), jnp.float32),
        ),
        grid=(grid_m, grid_k),
        in_specs=[
            pl.BlockSpec((tm, tk), lambda i, k: (i, k)),
            pl.BlockSpec((tk, OUT_FEATS), lambda i, k: (k, 0)),
            pl.BlockSpec((1, OUT_FEATS), lambda i, k: (0, 0)),
        ],
        out_specs=(
            pl.BlockSpec((tm, OUT_FEATS), lambda i, k: (i, 0)),
            pl.BlockSpec((1, 1, OUT_FEATS), lambda i, k: (i, 0, 0)),
            pl.BlockSpec((1, 1, OUT_FEATS), lambda i, k: (i, 0, 0)),
        ),
        scratch_shapes=[pltpu.VMEM((tm, OUT_FEATS), jnp.float32)],
        compiler_params=pltpu.CompilerParams(
            dimension_semantics=("parallel", "arbitrary"),
            vmem_limit_bytes=32 * 1024 * 1024,
        ),
    )(a_hat, h, b2)

    # 3) tiny cross-tile reduction for BatchNorm batch statistics (grid_m*64 floats, negligible).
    total = jnp.sum(psum[:, 0, :], axis=0)
    total_sq = jnp.sum(psq[:, 0, :], axis=0)
    mean = total / n
    var = jnp.maximum(total_sq / n - mean * mean, 0.0)   # biased variance (train mode)
    inv_std = lax.rsqrt(var + BN_EPS)
    scale = (gamma * inv_std).reshape(1, OUT_FEATS).astype(jnp.float32)
    shift = (beta - mean * gamma * inv_std).reshape(1, OUT_FEATS).astype(jnp.float32)

    # 4) apply the affine normalization, row-tiled.
    out = pl.pallas_call(
        bn_apply_kernel,
        out_shape=jax.ShapeDtypeStruct((n_pad, OUT_FEATS), jnp.float32),
        grid=(grid_m,),
        in_specs=[
            pl.BlockSpec((tm, OUT_FEATS), lambda i: (i, 0)),
            pl.BlockSpec((1, OUT_FEATS), lambda i: (0, 0)),
            pl.BlockSpec((1, OUT_FEATS), lambda i: (0, 0)),
        ],
        out_specs=pl.BlockSpec((tm, OUT_FEATS), lambda i: (i, 0)),
        compiler_params=pltpu.CompilerParams(
            dimension_semantics=("parallel",),
            vmem_limit_bytes=32 * 1024 * 1024,
        ),
    )(y, scale, shift)

    return out[:n]


if __name__ == "__main__":
    key = jax.random.PRNGKey(0)
    N, E = 8, 16  # small graph: 8 nodes, 16 directed edges, symmetrized below
    kx, kw, ks, kd = jax.random.split(key, 4)

    x = jax.random.normal(kx, (N, IN_FEATS), dtype=jnp.float32)

    src = jax.random.randint(ks, (E,), 0, N, dtype=jnp.int32)
    dst = jax.random.randint(kd, (E,), 0, N, dtype=jnp.int32)
    edge_index = jnp.stack(
        [jnp.concatenate([src, dst]), jnp.concatenate([dst, src])], axis=0
    )

    # Parameter init matching GCNConv(200, 64) + BatchNorm1d(64):
    limit = (6.0 / (IN_FEATS + OUT_FEATS)) ** 0.5
    w = jax.random.uniform(kw, (IN_FEATS, OUT_FEATS), jnp.float32, -limit, limit)
    bias = jnp.zeros((OUT_FEATS,), jnp.float32)    # GCNConv bias init = zeros
    gamma = jnp.ones((OUT_FEATS,), jnp.float32)    # BatchNorm1d weight init = ones
    beta = jnp.zeros((OUT_FEATS,), jnp.float32)    # BatchNorm1d bias init = zeros

    # TODO(synk): BatchNorm1d running-mean/var bookkeeping (training-side state) is not modeled;
    # forward uses batch statistics, matching the module in training mode.
    out = labelg_forward(x, edge_index, w, bias, gamma, beta)
    jax.block_until_ready(out)
    assert out.shape == (N, OUT_FEATS)
    print("KERNEL_OK")
</pallas_src>

<mosaic_0001>
module attributes {stable_mosaic.version = 11 : i64} {
  func.func @linear_kernel(%arg0: i32, %arg1: memref<128x256xf32, #tpu.memory_space<vmem>>, %arg2: memref<256x64xf32, #tpu.memory_space<vmem>>, %arg3: memref<128x64xbf16, #tpu.memory_space<vmem>>) attributes {dimension_semantics = [#tpu.dimension_semantics<parallel>], iteration_bounds = array<i64: 1>, scalar_prefetch = 0 : i64, scratch_operands = 0 : i64, tpu.core_type = #tpu.core_type<tc>, window_params = [{transform_indices = @transform_0, window_bounds = array<i64: 128, 256>}, {pipeline_mode = #tpu.pipeline_mode<synchronous>, transform_indices = @transform_1, window_bounds = array<i64: 256, 64>}, {transform_indices = @transform_2, window_bounds = array<i64: 128, 64>}]} {
    %c0 = arith.constant 0 : index
    %c0_0 = arith.constant 0 : index
    %0 = vector.load %arg1[%c0, %c0_0] : memref<128x256xf32, #tpu.memory_space<vmem>>, vector<128x256xf32>
    %c0_1 = arith.constant 0 : index
    %c0_2 = arith.constant 0 : index
    %1 = vector.load %arg2[%c0_1, %c0_2] : memref<256x64xf32, #tpu.memory_space<vmem>>, vector<256x64xf32>
    %cst = arith.constant dense<0.000000e+00> : vector<128x64xf32>
    %2 = tpu.matmul %0, %1, %cst {dimension_numbers = #tpu.dot_dimension_numbers<[1], [0], [0], [1], [0, 0, 1, 1], [], []>} : vector<128x256xf32>, vector<256x64xf32>, vector<128x64xf32> -> vector<128x64xf32>
    %3 = arith.truncf %2 : vector<128x64xf32> to vector<128x64xbf16>
    %c0_3 = arith.constant 0 : index
    %c0_4 = arith.constant 0 : index
    %4 = vector.load %arg3[%c0_3, %c0_4] : memref<128x64xbf16, #tpu.memory_space<vmem>>, vector<128x64xbf16>
    tpu.vector_store %arg3[%c0_3, %c0_4], %3 {strides = array<i32>} : memref<128x64xbf16, #tpu.memory_space<vmem>>, vector<128x64xbf16>,
    return
  }
  func.func @transform_0(%arg0: i32) -> (i32, i32) {
    %c0_i32 = arith.constant 0 : i32
    %c0_i32_0 = arith.constant 0 : i32
    return %arg0, %c0_i32 : i32, i32
  }
  func.func @transform_1(%arg0: i32) -> (i32, i32) {
    %c0_i32 = arith.constant 0 : i32
    %c0_i32_0 = arith.constant 0 : i32
    %c0_i32_1 = arith.constant 0 : i32
    return %c0_i32, %c0_i32_0 : i32, i32
  }
  func.func @transform_2(%arg0: i32) -> (i32, i32) {
    %c0_i32 = arith.constant 0 : i32
    %c0_i32_0 = arith.constant 0 : i32
    return %arg0, %c0_i32 : i32, i32
  }
}

</mosaic_0001>

<llo_original>
// kernel: tpu_custom_call.1
$region0: #{tpu_custom_call.1}
  #allocation0 [shape = 'u32[]', space=smem, size = 0x4, offset = 0x4, fixed_abs, tag = 'smem constant byte address 0x4 - core index']
  #allocation1 [shape = 'u32[144,128]{1,0:T(1,128)}', space=vmem, size = 0x12000, scoped, tag = 'internal scratch']
  %s0 = inlined_call_operand.vmem [shape: f32[128,256], index: 0, kind: input, shape index: {}]
  %s1 = inlined_call_operand.vmem [shape: f32[256,64], index: 1, kind: input, shape index: {}]
  %s2 = inlined_call_operand.vmem [shape: bf16[128,64], index: 2, kind: output, shape index: {}]
  %s3 = sld [smem:[#allocation0]]
  $region18: #{tpu_custom_call.1} parent=0
    _
  %s5 = ssub.s32 1, %s3
  %s6 = scalar_select 0, %s5, %s3
  // Predicated region
  $region2: #{tpu_custom_call.1} parent=0 // pred_check
    _
  $region3: #{tpu_custom_call.1} parent=0 // pred_check_branch
    %8 = sbr.rel (0) target = $region5
  $region4: #{tpu_custom_call.1} parent=0 // pred_region
    _
  $region5: #{tpu_custom_call.1} parent=0 // pred_fallthru
    _
  // Predicated region
  $region6: #{tpu_custom_call.1} parent=0 // pred_check
    _
  $region7: #{tpu_custom_call.1} parent=0 // pred_check_branch
    %10 = sbr.rel (0) target = $region9
  $region8: #{tpu_custom_call.1} parent=0 // pred_region
    _
  $region9: #{tpu_custom_call.1} parent=0 // pred_fallthru
    _
  %v11 = vld [vmem:[%s0] sm:$0xff]
  %v12 = vld [vmem:[%s0 + $0x8] sm:$0xff]
  %v13 = vld [vmem:[%s0 + $0x10] sm:$0xff]
  %v14 = vld [vmem:[%s0 + $0x18] sm:$0xff]
  %v15 = vld [vmem:[%s0 + $0x20] sm:$0xff]
  %v16 = vld [vmem:[%s0 + $0x28] sm:$0xff]
  %v17 = vld [vmem:[%s0 + $0x30] sm:$0xff]
  %v18 = vld [vmem:[%s0 + $0x38] sm:$0xff]
  %v19 = vld [vmem:[%s0 + $0x40] sm:$0xff]
  %v20 = vld [vmem:[%s0 + $0x48] sm:$0xff]
  %v21 = vld [vmem:[%s0 + $0x50] sm:$0xff]
  %v22 = vld [vmem:[%s0 + $0x58] sm:$0xff]
  %v23 = vld [vmem:[%s0 + $0x60] sm:$0xff]
  %v24 = vld [vmem:[%s0 + $0x68] sm:$0xff]
  %v25 = vld [vmem:[%s0 + $0x70] sm:$0xff]
  %v26 = vld [vmem:[%s0 + $0x78] sm:$0xff]
  %v27 = vld [vmem:[%s0 + $0x80] sm:$0xff]
  %v28 = vld [vmem:[%s0 + $0x88] sm:$0xff]
  %v29 = vld [vmem:[%s0 + $0x90] sm:$0xff]
  %v30 = vld [vmem:[%s0 + $0x98] sm:$0xff]
  %v31 = vld [vmem:[%s0 + $0xa0] sm:$0xff]
  %v32 = vld [vmem:[%s0 + $0xa8] sm:$0xff]
  %v33 = vld [vmem:[%s0 + $0xb0] sm:$0xff]
  %v34 = vld [vmem:[%s0 + $0xb8] sm:$0xff]
  %v35 = vld [vmem:[%s0 + $0xc0] sm:$0xff]
  %v36 = vld [vmem:[%s0 + $0xc8] sm:$0xff]
  %v37 = vld [vmem:[%s0 + $0xd0] sm:$0xff]
  %v38 = vld [vmem:[%s0 + $0xd8] sm:$0xff]
  %v39 = vld [vmem:[%s0 + $0xe0] sm:$0xff]
  %v40 = vld [vmem:[%s0 + $0xe8] sm:$0xff]
  %v41 = vld [vmem:[%s0 + $0xf0] sm:$0xff]
  %v42 = vld [vmem:[%s0 + $0xf8] sm:$0xff]
  %v43 = vld [vmem:[%s1] sm:$0xff]
  %v44 = vld [vmem:[%s1 + $0x8] sm:$0xff]
  %v45 = vld [vmem:[%s1 + $0x10] sm:$0xff]
  %v46 = vld [vmem:[%s1 + $0x18] sm:$0xff]
  %v47 = vld [vmem:[%s1 + $0x20] sm:$0xff]
  %v48 = vld [vmem:[%s1 + $0x28] sm:$0xff]
  %v49 = vld [vmem:[%s1 + $0x30] sm:$0xff]
  %v50 = vld [vmem:[%s1 + $0x38] sm:$0xff]
  %v51 = vld [vmem:[%s1 + $0x40] sm:$0xff]
  %v52 = vld [vmem:[%s1 + $0x48] sm:$0xff]
  %v53 = vld [vmem:[%s1 + $0x50] sm:$0xff]
  %v54 = vld [vmem:[%s1 + $0x58] sm:$0xff]
  %v55 = vld [vmem:[%s1 + $0x60] sm:$0xff]
  %v56 = vld [vmem:[%s1 + $0x68] sm:$0xff]
  %v57 = vld [vmem:[%s1 + $0x70] sm:$0xff]
  %v58 = vld [vmem:[%s1 + $0x78] sm:$0xff]
  %v59 = vld [vmem:[%s1 + $0x80] sm:$0xff]
  %v60 = vld [vmem:[%s1 + $0x88] sm:$0xff]
  %v61 = vld [vmem:[%s1 + $0x90] sm:$0xff]
  %v62 = vld [vmem:[%s1 + $0x98] sm:$0xff]
  %v63 = vld [vmem:[%s1 + $0xa0] sm:$0xff]
  %v64 = vld [vmem:[%s1 + $0xa8] sm:$0xff]
  %v65 = vld [vmem:[%s1 + $0xb0] sm:$0xff]
  %v66 = vld [vmem:[%s1 + $0xb8] sm:$0xff]
  %v67 = vld [vmem:[%s1 + $0xc0] sm:$0xff]
  %v68 = vld [vmem:[%s1 + $0xc8] sm:$0xff]
  %v69 = vld [vmem:[%s1 + $0xd0] sm:$0xff]
  %v70 = vld [vmem:[%s1 + $0xd8] sm:$0xff]
  %v71 = vld [vmem:[%s1 + $0xe0] sm:$0xff]
  %v72 = vld [vmem:[%s1 + $0xe8] sm:$0xff]
  %v73 = vld [vmem:[%s1 + $0xf0] sm:$0xff]
  %v74 = vld [vmem:[%s1 + $0xf8] sm:$0xff]
  %75 = vmatprep.subr.mxu0 0.0
  %76 = vmatpush1.msra.mxu0 %v58
  %77 = vmatprep.subr.mxu0 0.0
  %78 = vmatpush1.msra.mxu0 %v57
  %79 = vmatprep.subr.mxu0 0.0
  %80 = vmatpush1.msra.mxu0 %v56
  %81 = vmatprep.subr.mxu0 0.0
  %82 = vmatpush1.msra.mxu0 %v55
  %83 = vmatprep.subr.mxu0 0.0
  %84 = vmatpush1.msra.mxu0 %v54
  %85 = vmatprep.subr.mxu0 0.0
  %86 = vmatpush1.msra.mxu0 %v53
  %87 = vmatprep.subr.mxu0 0.0
  %88 = vmatpush1.msra.mxu0 %v52
  %89 = vmatprep.subr.mxu0 0.0
  %90 = vmatpush1.msra.mxu0 %v51
  %91 = vmatprep.subr.mxu0 0.0
  %92 = vmatpush1.msra.mxu0 %v50
  %93 = vmatprep.subr.mxu0 0.0
  %94 = vmatpush1.msra.mxu0 %v49
  %95 = vmatprep.subr.mxu0 0.0
  %96 = vmatpush1.msra.mxu0 %v48
  %97 = vmatprep.subr.mxu0 0.0
  %98 = vmatpush1.msra.mxu0 %v47
  %99 = vmatprep.subr.mxu0 0.0
  %100 = vmatpush1.msra.mxu0 %v46
  %101 = vmatprep.subr.mxu0 0.0
  %102 = vmatpush1.msra.mxu0 %v45
  %103 = vmatprep.subr.mxu0 0.0
  %104 = vmatpush1.msra.mxu0 %v44
  %105 = vmatprep.subr.mxu0 0.0
  %106 = vmatpush1.msra.mxu0 %v43
  %107 = vmatprep.subr.mxu0 0.0
  %108 = vmatpush2.msra.mxu0 %v74
  %109 = vmatprep.subr.mxu0 0.0
  %110 = vmatpush2.msra.mxu0 %v73
  %111 = vmatprep.subr.mxu0 0.0
  %112 = vmatpush2.msra.mxu0 %v72
  %113 = vmatprep.subr.mxu0 0.0
  %114 = vmatpush2.msra.mxu0 %v71
  %115 = vmatprep.subr.mxu0 0.0
  %116 = vmatpush2.msra.mxu0 %v70
  %117 = vmatprep.subr.mxu0 0.0
  %118 = vmatpush2.msra.mxu0 %v69
  %119 = vmatprep.subr.mxu0 0.0
  %120 = vmatpush2.msra.mxu0 %v68
  %121 = vmatprep.subr.mxu0 0.0
  %122 = vmatpush2.msra.mxu0 %v67
  %123 = vmatprep.subr.mxu0 0.0
  %124 = vmatpush2.msra.mxu0 %v66
  %125 = vmatprep.subr.mxu0 0.0
  %126 = vmatpush2.msra.mxu0 %v65
  %127 = vmatprep.subr.mxu0 0.0
  %128 = vmatpush2.msra.mxu0 %v64
  %129 = vmatprep.subr.mxu0 0.0
  %130 = vmatpush2.msra.mxu0 %v63
  %131 = vmatprep.subr.mxu0 0.0
  %132 = vmatpush2.msra.mxu0 %v62
  %133 = vmatprep.subr.mxu0 0.0
  %134 = vmatpush2.msra.mxu0 %v61
  %135 = vmatprep.subr.mxu0 0.0
  %136 = vmatpush2.msra.mxu0 %v60
  %137 = vmatprep.subr.mxu0 0.0
  %138 = vmatpush2.msra.mxu0 %v59
  %139 = vmatprep.mubr.f32.mxu0 %v12
  %140 = vmatmul.mubr.f32.gmra.mxu0 %v11
  %v141 = vpop.f32.mrf.mxu0
  %v142 = vadd.f32 0.0, %v141
  %v143 = vpop.f32.mrf.mxu0
  %144 = vmatprep.mubr.f32.mxu0 %v14
  %145 = vmatmul.mubr.f32.gmra.mxu0 %v13
  %v146 = vpop.f32.mrf.mxu0
  %v147 = vadd.f32 0.0, %v146
  %v148 = vpop.f32.mrf.mxu0
  %149 = vmatprep.mubr.f32.mxu0 %v16
  %150 = vmatmul.mubr.f32.gmra.mxu0 %v15
  %v151 = vpop.f32.mrf.mxu0
  %v152 = vadd.f32 0.0, %v151
  %v153 = vpop.f32.mrf.mxu0
  %154 = vmatprep.mubr.f32.mxu0 %v18
  %155 = vmatmul.mubr.f32.gmra.mxu0 %v17
  %v156 = vpop.f32.mrf.mxu0
  %v157 = vadd.f32 0.0, %v156
  %v158 = vpop.f32.mrf.mxu0
  %159 = vmatprep.mubr.f32.mxu0 %v20
  %160 = vmatmul.mubr.f32.gmra.mxu0 %v19
  %v161 = vpop.f32.mrf.mxu0
  %v162 = vadd.f32 0.0, %v161
  %v163 = vpop.f32.mrf.mxu0
  %164 = vmatprep.mubr.f32.mxu0 %v22
  %165 = vmatmul.mubr.f32.gmra.mxu0 %v21
  %v166 = vpop.f32.mrf.mxu0
  %v167 = vadd.f32 0.0, %v166
  %v168 = vpop.f32.mrf.mxu0
  %169 = vmatprep.mubr.f32.mxu0 %v24
  %170 = vmatmul.mubr.f32.gmra.mxu0 %v23
  %v171 = vpop.f32.mrf.mxu0
  %v172 = vadd.f32 0.0, %v171
  %v173 = vpop.f32.mrf.mxu0
  %174 = vmatprep.mubr.f32.mxu0 %v26
  %175 = vmatmul.mubr.f32.gmra.mxu0 %v25
  %v176 = vpop.f32.mrf.mxu0
  %v177 = vadd.f32 0.0, %v176
  %v178 = vpop.f32.mrf.mxu0
  %179 = vmatprep.mubr.f32.mxu0 %v28
  %180 = vmatmul.mubr.f32.gmra.mxu0 %v27
  %v181 = vpop.f32.mrf.mxu0
  %v182 = vadd.f32 0.0, %v181
  %v183 = vpop.f32.mrf.mxu0
  %184 = vmatprep.mubr.f32.mxu0 %v30
  %185 = vmatmul.mubr.f32.gmra.mxu0 %v29
  %v186 = vpop.f32.mrf.mxu0
  %v187 = vadd.f32 0.0, %v186
  %v188 = vpop.f32.mrf.mxu0
  %189 = vmatprep.mubr.f32.mxu0 %v32
  %190 = vmatmul.mubr.f32.gmra.mxu0 %v31
  %v191 = vpop.f32.mrf.mxu0
  %v192 = vadd.f32 0.0, %v191
  %v193 = vpop.f32.mrf.mxu0
  %194 = vmatprep.mubr.f32.mxu0 %v34
  %195 = vmatmul.mubr.f32.gmra.mxu0 %v33
  %v196 = vpop.f32.mrf.mxu0
  %v197 = vadd.f32 0.0, %v196
  %v198 = vpop.f32.mrf.mxu0
  %199 = vmatprep.mubr.f32.mxu0 %v36
  %200 = vmatmul.mubr.f32.gmra.mxu0 %v35
  %v201 = vpop.f32.mrf.mxu0
  %v202 = vadd.f32 0.0, %v201
  %v203 = vpop.f32.mrf.mxu0
  %204 = vmatprep.mubr.f32.mxu0 %v38
  %205 = vmatmul.mubr.f32.gmra.mxu0 %v37
  %v206 = vpop.f32.mrf.mxu0
  %v207 = vadd.f32 0.0, %v206
  %v208 = vpop.f32.mrf.mxu0
  %209 = vmatprep.mubr.f32.mxu0 %v40
  %210 = vmatmul.mubr.f32.gmra.mxu0 %v39
  %v211 = vpop.f32.mrf.mxu0
  %v212 = vadd.f32 0.0, %v211
  %v213 = vpop.f32.mrf.mxu0
  %214 = vmatprep.mubr.f32.mxu0 %v42
  %215 = vmatmul.mubr.f32.gmra.mxu0 %v41
  %v216 = vpop.f32.mrf.mxu0
  %v217 = vadd.f32 0.0, %v216
  %v218 = vpop.f32.mrf.mxu0
  %219 = vdwg.mxu0
  %v220 = vpack.c.bf16 %v147, %v142
  %v221 = vpack.c.bf16 %v157, %v152
  %v222 = vpack.c.bf16 %v167, %v162
  %v223 = vpack.c.bf16 %v177, %v172
  %v224 = vpack.c.bf16 %v187, %v182
  %v225 = vpack.c.bf16 %v197, %v192
  %v226 = vpack.c.bf16 %v207, %v202
  %v227 = vpack.c.bf16 %v217, %v212
  %v236 = vunpack.c.l.b16 %v220
  %v237 = vunpack.c.h.b16 %v220
  %v238 = vunpack.c.l.b16 %v221
  %v239 = vunpack.c.h.b16 %v221
  %v240 = vunpack.c.l.b16 %v222
  %v241 = vunpack.c.h.b16 %v222
  %v242 = vunpack.c.l.b16 %v223
  %v243 = vunpack.c.h.b16 %v223
  %v244 = vunpack.c.l.b16 %v224
  %v245 = vunpack.c.h.b16 %v224
  %v246 = vunpack.c.l.b16 %v225
  %v247 = vunpack.c.h.b16 %v225
  %v248 = vunpack.c.l.b16 %v226
  %v249 = vunpack.c.h.b16 %v226
  %v250 = vunpack.c.l.b16 %v227
  %v251 = vunpack.c.h.b16 %v227
  %v252 = vpack.c.b16 %v236, %v236
  %v253 = vpack.c.b16 %v237, %v237
  %v254 = vpack.c.b16 %v238, %v238
  %v255 = vpack.c.b16 %v239, %v239
  %v256 = vpack.c.b16 %v240, %v240
  %v257 = vpack.c.b16 %v241, %v241
  %v258 = vpack.c.b16 %v242, %v242
  %v259 = vpack.c.b16 %v243, %v243
  %v260 = vpack.c.b16 %v244, %v244
  %v261 = vpack.c.b16 %v245, %v245
  %v262 = vpack.c.b16 %v246, %v246
  %v263 = vpack.c.b16 %v247, %v247
  %v264 = vpack.c.b16 %v248, %v248
  %v265 = vpack.c.b16 %v249, %v249
  %v266 = vpack.c.b16 %v250, %v250
  %v267 = vpack.c.b16 %v251, %v251
  %vm284 = vcmask 519168
  %285 = vst.msk [vmem:[%s2] sm:$0xf] %vm284, %v252
  %286 = vst.msk [vmem:[%s2 + $0x4] sm:$0xf] %vm284, %v253
  %287 = vst.msk [vmem:[%s2 + $0x8] sm:$0xf] %vm284, %v254
  %288 = vst.msk [vmem:[%s2 + $0xc] sm:$0xf] %vm284, %v255
  %289 = vst.msk [vmem:[%s2 + $0x10] sm:$0xf] %vm284, %v256
  %290 = vst.msk [vmem:[%s2 + $0x14] sm:$0xf] %vm284, %v257
  %291 = vst.msk [vmem:[%s2 + $0x18] sm:$0xf] %vm284, %v258
  %292 = vst.msk [vmem:[%s2 + $0x1c] sm:$0xf] %vm284, %v259
  %293 = vst.msk [vmem:[%s2 + $0x20] sm:$0xf] %vm284, %v260
  %294 = vst.msk [vmem:[%s2 + $0x24] sm:$0xf] %vm284, %v261
  %295 = vst.msk [vmem:[%s2 + $0x28] sm:$0xf] %vm284, %v262
  %296 = vst.msk [vmem:[%s2 + $0x2c] sm:$0xf] %vm284, %v263
  %297 = vst.msk [vmem:[%s2 + $0x30] sm:$0xf] %vm284, %v264
  %298 = vst.msk [vmem:[%s2 + $0x34] sm:$0xf] %vm284, %v265
  %299 = vst.msk [vmem:[%s2 + $0x38] sm:$0xf] %vm284, %v266
  %300 = vst.msk [vmem:[%s2 + $0x3c] sm:$0xf] %vm284, %v267
  // Predicated region
  $region10: #{tpu_custom_call.1} parent=0 // pred_check
    _
  $region11: #{tpu_custom_call.1} parent=0 // pred_check_branch
    %302 = sbr.rel (0) target = $region13
  $region12: #{tpu_custom_call.1} parent=0 // pred_region
    _
  $region13: #{tpu_custom_call.1} parent=0 // pred_fallthru
    _
  // Predicated region
  $region14: #{tpu_custom_call.1} parent=0 // pred_check
    _
  $region15: #{tpu_custom_call.1} parent=0 // pred_check_branch
    %304 = sbr.rel (0) target = $region17
  $region16: #{tpu_custom_call.1} parent=0 // pred_region
    _
  $region17: #{tpu_custom_call.1} parent=0 // pred_fallthru
    _

</llo_original>
